<compile_context>
chip_gen: v5e
topology: v5e:2x2
jax: 0.10.0
libtpu: 0.0.40
codegen_flags: <defaults>
</compile_context>

<pallas_src>
import functools

import jax
import jax.numpy as jnp
from jax.experimental import pallas as pl
from jax.experimental.pallas import tpu as pltpu

LN_EPS = 1e-5


def _round_up(n, m):
    return ((n + m - 1) // m) * m


def residual_block_kernel(
    x_ref,      # [TB, In_p]           bf16
    w1r_ref,    # [In_p, H_p + O_p]    bf16, fused [W1^T | Wr^T], zero padded
    b1_ref,     # [1, H_p]             f32
    w2_ref,     # [H_p, O_p]           bf16
    b2r_ref,    # [1, O_p]             f32, fused b2 + br
    lnw_ref,    # [1, O_p]             f32
    lnb_ref,    # [1, O_p]             f32
    out_ref,    # [TB, O_p]            f32
    *,
    h_pad,      # static: padded hidden width (multiple of 128)
    o_true,     # static: true (unpadded) LayerNorm width
):
    # Fused x-side GEMM on the MXU (bf16 operands, f32 accumulate).
    z = jnp.dot(x_ref[...], w1r_ref[...], preferred_element_type=jnp.float32)

    # linear_1 + ReLU (f32 epilogue).
    h = jnp.maximum(z[:, :h_pad] + b1_ref[...], 0.0)

    # linear_2 (padded hidden columns are exactly zero -> no contribution).
    h2 = jnp.dot(h.astype(jnp.bfloat16), w2_ref[...],
                 preferred_element_type=jnp.float32)

    # dropout: identity in inference mode.
    # TODO(synk): training-mode dropout (pltpu.prng_random_bits mask) not implemented.

    out = h2 + z[:, h_pad:] + b2r_ref[...]          # + residual + fused (b2 + br)

    # LayerNorm over the true O columns (biased variance, eps=1e-5).
    # Padded columns of `out` are exactly zero, so plain sums / o_true give the
    # correct mean and E[x^2] -- no iota/where lane mask needed.
    inv_o = 1.0 / o_true
    mean = jnp.sum(out, axis=-1, keepdims=True) * inv_o
    ex2 = jnp.sum(out * out, axis=-1, keepdims=True) * inv_o
    var = jnp.maximum(ex2 - mean * mean, 0.0)
    normed = (out - mean) * jax.lax.rsqrt(var + LN_EPS)
    # ln_w / ln_b are zero-padded, so padded output columns stay exactly zero.
    out_ref[...] = normed * lnw_ref[...] + lnb_ref[...]


def prepare_params(params):
    """Hoist weight_norm, transposes, bias fusion and lane padding out of the kernel."""
    v1, g1 = params["v1"], params["g1"]
    w1 = g1 * v1 * jax.lax.rsqrt(jnp.sum(v1 * v1, axis=1, keepdims=True))  # [H, In]
    h_dim, in_dim = w1.shape
    o_dim = params["wr"].shape[0]

    in_p = _round_up(in_dim, 128)
    h_p = _round_up(h_dim, 128)
    o_p = _round_up(o_dim, 128)

    w1_t = jnp.zeros((in_p, h_p), jnp.float32).at[:in_dim, :h_dim].set(w1.T)
    wr_t = jnp.zeros((in_p, o_p), jnp.float32).at[:in_dim, :o_dim].set(params["wr"].T)
    w2_t = jnp.zeros((h_p, o_p), jnp.float32).at[:h_dim, :o_dim].set(params["w2"].T)

    def pad_row(v, n):
        return jnp.zeros((1, n), jnp.float32).at[:, : v.shape[1]].set(v)

    return {
        "w1r": jnp.concatenate([w1_t, wr_t], axis=1).astype(jnp.bfloat16),  # [In_p, H_p+O_p]
        "w2": w2_t.astype(jnp.bfloat16),
        "b1": pad_row(params["b1"], h_p),
        "b2r": pad_row(params["b2"] + params["br"], o_p),   # fused output bias
        "ln_w": pad_row(params["ln_w"], o_p),
        "ln_b": pad_row(params["ln_b"], o_p),
        "dims": (in_dim, h_dim, o_dim, in_p, h_p, o_p),
    }


def _vmem_cap_bytes():
    # Generation-aware cap: ~128 MiB on v5e/v6e, ~64 MiB per TC on v7x.
    try:
        cap = int(pltpu.get_tpu_info().vmem_capacity_bytes)
    except Exception:
        cap = 64 << 20          # conservative fallback, safe on every generation
    return max(int(cap * 0.85), 16 << 20)


def residual_block(x, prep, *, batch_tile=512):
    in_dim, h_dim, o_dim, in_p, h_p, o_p = prep["dims"]
    b = x.shape[0]

    # Batch tiling: large tiles amortize the ~0.35us per-step overhead; keep at
    # least 2 tiles when the batch allows so both v7x TensorCores get work.
    b_8 = _round_up(b, 8)
    if b_8 >= 2 * batch_tile:
        tb = batch_tile
    elif b_8 >= 16:
        tb = _round_up((b_8 + 1) // 2, 8)
    else:
        tb = b_8
    b_p = _round_up(b_8, tb)
    n_tiles = b_p // tb

    # Pad batch/features only when needed; kernel consumes bf16 x (half HBM traffic).
    if b_p == b and in_p == in_dim:
        x_p = x.astype(jnp.bfloat16)
    else:
        x_p = (jnp.zeros((b_p, in_p), jnp.float32)
               .at[:b, :in_dim].set(x)
               .astype(jnp.bfloat16))

    const = lambda i: (0, 0)
    resident = pl.Buffered(1)   # weights/vectors never change across the grid
    kernel = functools.partial(residual_block_kernel, h_pad=h_p, o_true=o_dim)

    # VMEM budget: single-buffered weights + double-buffered x/out tiles +
    # in-kernel f32 intermediates (z, h, out, normed, ...) + headroom.
    w_bytes = 2 * (in_p * (h_p + o_p) + h_p * o_p) + 4 * (h_p + 3 * o_p)
    io_bytes = tb * (2 * in_p + 4 * o_p)
    tmp_bytes = 4 * tb * (2 * h_p + 5 * o_p)
    vmem_limit = int(min(max(w_bytes + 2 * io_bytes + tmp_bytes + (4 << 20),
                             16 << 20),
                         _vmem_cap_bytes()))

    out_p = pl.pallas_call(
        kernel,
        out_shape=jax.ShapeDtypeStruct((b_p, o_p), jnp.float32),
        grid=(n_tiles,),
        in_specs=[
            pl.BlockSpec((tb, in_p), lambda i: (i, 0)),                        # x tile
            pl.BlockSpec((in_p, h_p + o_p), const, pipeline_mode=resident),    # [W1^T|Wr^T]
            pl.BlockSpec((1, h_p), const, pipeline_mode=resident),             # b1
            pl.BlockSpec((h_p, o_p), const, pipeline_mode=resident),           # W2^T
            pl.BlockSpec((1, o_p), const, pipeline_mode=resident),             # b2 + br
            pl.BlockSpec((1, o_p), const, pipeline_mode=resident),             # ln_w
            pl.BlockSpec((1, o_p), const, pipeline_mode=resident),             # ln_b
        ],
        out_specs=pl.BlockSpec((tb, o_p), lambda i: (i, 0)),
        compiler_params=pltpu.CompilerParams(
            dimension_semantics=("parallel",),
            vmem_limit_bytes=vmem_limit,
        ),
    )(
        x_p,
        prep["w1r"], prep["b1"], prep["w2"], prep["b2r"],
        prep["ln_w"], prep["ln_b"],
    )
    return out_p[:b, :o_dim]


def init_params(key, d_in, d_hidden, d_out):
    ks = jax.random.split(key, 8)
    v1 = jax.random.normal(ks[0], (d_hidden, d_in), jnp.float32) * 0.1
    # weight_norm initializes g to the per-row norm of the initial weight.
    g1 = jnp.sqrt(jnp.sum(v1 * v1, axis=1, keepdims=True))
    return {
        "v1": v1,
        "g1": g1,
        "b1": (jax.random.normal(ks[1], (1, d_hidden), jnp.float32) * 0.1),
        "w2": (jax.random.normal(ks[2], (d_out, d_hidden), jnp.float32) * 0.1),
        "b2": (jax.random.normal(ks[3], (1, d_out), jnp.float32) * 0.1),
        "wr": (jax.random.normal(ks[4], (d_out, d_in), jnp.float32) * 0.1),
        "br": (jax.random.normal(ks[5], (1, d_out), jnp.float32) * 0.1),
        "ln_w": jnp.ones((1, d_out), jnp.float32),
        "ln_b": jnp.zeros((1, d_out), jnp.float32),
    }


def residual_block_ref(x, p):
    """Pure-JAX f32 reference for correctness checking."""
    v1, g1 = p["v1"], p["g1"]
    w1 = g1 * v1 / jnp.sqrt(jnp.sum(v1 * v1, axis=1, keepdims=True))
    h = jnp.maximum(x @ w1.T + p["b1"], 0.0)
    h = h @ p["w2"].T + p["b2"]
    res = x @ p["wr"].T + p["br"]
    out = h + res
    mean = jnp.mean(out, axis=-1, keepdims=True)
    var = jnp.mean((out - mean) ** 2, axis=-1, keepdims=True)
    return (out - mean) / jnp.sqrt(var + LN_EPS) * p["ln_w"] + p["ln_b"]


if __name__ == "__main__":
    B, D_IN, D_HIDDEN, D_OUT = 8, 16, 32, 16

    key = jax.random.PRNGKey(0)
    kx, kp = jax.random.split(key)
    x = jax.random.normal(kx, (B, D_IN), jnp.float32)
    params = init_params(kp, D_IN, D_HIDDEN, D_OUT)

    prep = prepare_params(params)
    out = residual_block(x, prep)
    out = jax.block_until_ready(out)

    ref = residual_block_ref(x, params)
    assert out.shape == (B, D_OUT)
    # bf16 MXU operands (f32 accumulation / epilogue) -> relaxed tolerance.
    assert jnp.allclose(out, ref, atol=3e-2, rtol=3e-2), "mismatch vs JAX reference"

    print("KERNEL_OK")
</pallas_src>

<mosaic_0001>
module attributes {stable_mosaic.version = 11 : i64} {
  func.func @residual_block_kernel(%arg0: i32, %arg1: memref<8x128xbf16, #tpu.memory_space<vmem>>, %arg2: memref<128x256xbf16, #tpu.memory_space<vmem>>, %arg3: memref<1x128xf32, #tpu.memory_space<vmem>>, %arg4: memref<128x128xbf16, #tpu.memory_space<vmem>>, %arg5: memref<1x128xf32, #tpu.memory_space<vmem>>, %arg6: memref<1x128xf32, #tpu.memory_space<vmem>>, %arg7: memref<1x128xf32, #tpu.memory_space<vmem>>, %arg8: memref<8x128xf32, #tpu.memory_space<vmem>>) attributes {dimension_semantics = [#tpu.dimension_semantics<parallel>], iteration_bounds = array<i64: 1>, scalar_prefetch = 0 : i64, scratch_operands = 0 : i64, tpu.core_type = #tpu.core_type<tc>, window_params = [{transform_indices = @transform_0, window_bounds = array<i64: 8, 128>}, {pipeline_mode = #tpu.pipeline_mode<synchronous>, transform_indices = @transform_1, window_bounds = array<i64: 128, 256>}, {pipeline_mode = #tpu.pipeline_mode<synchronous>, transform_indices = @transform_2, window_bounds = array<i64: 1, 128>}, {pipeline_mode = #tpu.pipeline_mode<synchronous>, transform_indices = @transform_3, window_bounds = array<i64: 128, 128>}, {pipeline_mode = #tpu.pipeline_mode<synchronous>, transform_indices = @transform_4, window_bounds = array<i64: 1, 128>}, {pipeline_mode = #tpu.pipeline_mode<synchronous>, transform_indices = @transform_5, window_bounds = array<i64: 1, 128>}, {pipeline_mode = #tpu.pipeline_mode<synchronous>, transform_indices = @transform_6, window_bounds = array<i64: 1, 128>}, {transform_indices = @transform_7, window_bounds = array<i64: 8, 128>}]} {
    %c0 = arith.constant 0 : index
    %c0_0 = arith.constant 0 : index
    %0 = vector.load %arg1[%c0, %c0_0] : memref<8x128xbf16, #tpu.memory_space<vmem>>, vector<8x128xbf16>
    %c0_1 = arith.constant 0 : index
    %c0_2 = arith.constant 0 : index
    %1 = vector.load %arg2[%c0_1, %c0_2] : memref<128x256xbf16, #tpu.memory_space<vmem>>, vector<128x256xbf16>
    %cst = arith.constant dense<0.000000e+00> : vector<8x256xf32>
    %2 = tpu.matmul %0, %1, %cst {dimension_numbers = #tpu.dot_dimension_numbers<[1], [0], [0], [1], [0, 0, 1, 1], [], []>} : vector<8x128xbf16>, vector<128x256xbf16>, vector<8x256xf32> -> vector<8x256xf32>
    %3 = vector.extract_strided_slice %2 {offsets = [0, 0], sizes = [8, 128], strides = [1, 1]} : vector<8x256xf32> to vector<8x128xf32>
    %c0_3 = arith.constant 0 : index
    %c0_4 = arith.constant 0 : index
    %4 = vector.load %arg3[%c0_3, %c0_4] : memref<1x128xf32, #tpu.memory_space<vmem>>, vector<1x128xf32>
    %5 = vector.broadcast %4 : vector<1x128xf32> to vector<8x128xf32>
    %6 = arith.addf %3, %5 : vector<8x128xf32>
    %cst_5 = arith.constant 0.000000e+00 : f32
    %7 = vector.broadcast %cst_5 : f32 to vector<8x128xf32>
    %8 = arith.maximumf %6, %7 : vector<8x128xf32>
    %9 = arith.truncf %8 : vector<8x128xf32> to vector<8x128xbf16>
    %c0_6 = arith.constant 0 : index
    %c0_7 = arith.constant 0 : index
    %10 = vector.load %arg4[%c0_6, %c0_7] : memref<128x128xbf16, #tpu.memory_space<vmem>>, vector<128x128xbf16>
    %cst_8 = arith.constant dense<0.000000e+00> : vector<8x128xf32>
    %11 = tpu.matmul %9, %10, %cst_8 {dimension_numbers = #tpu.dot_dimension_numbers<[1], [0], [0], [1], [0, 0, 1, 1], [], []>} : vector<8x128xbf16>, vector<128x128xbf16>, vector<8x128xf32> -> vector<8x128xf32>
    %12 = vector.extract_strided_slice %2 {offsets = [0, 128], sizes = [8, 128], strides = [1, 1]} : vector<8x256xf32> to vector<8x128xf32>
    %13 = arith.addf %11, %12 : vector<8x128xf32>
    %c0_9 = arith.constant 0 : index
    %c0_10 = arith.constant 0 : index
    %14 = vector.load %arg5[%c0_9, %c0_10] : memref<1x128xf32, #tpu.memory_space<vmem>>, vector<1x128xf32>
    %15 = vector.broadcast %14 : vector<1x128xf32> to vector<8x128xf32>
    %16 = arith.addf %13, %15 : vector<8x128xf32>
    %cst_11 = arith.constant dense<0.000000e+00> : vector<8xf32>
    %17 = vector.multi_reduction <add>, %16, %cst_11 [1] : vector<8x128xf32> to vector<8xf32>
    %18 = vector.shape_cast %17 : vector<8xf32> to vector<8x1xf32>
    %cst_12 = arith.constant 6.250000e-02 : f32
    %19 = vector.broadcast %cst_12 : f32 to vector<8x1xf32>
    %20 = arith.mulf %18, %19 : vector<8x1xf32>
    %21 = arith.mulf %16, %16 : vector<8x128xf32>
    %cst_13 = arith.constant dense<0.000000e+00> : vector<8xf32>
    %22 = vector.multi_reduction <add>, %21, %cst_13 [1] : vector<8x128xf32> to vector<8xf32>
    %23 = vector.shape_cast %22 : vector<8xf32> to vector<8x1xf32>
    %cst_14 = arith.constant 6.250000e-02 : f32
    %24 = vector.broadcast %cst_14 : f32 to vector<8x1xf32>
    %25 = arith.mulf %23, %24 : vector<8x1xf32>
    %26 = arith.mulf %20, %20 : vector<8x1xf32>
    %27 = arith.subf %25, %26 : vector<8x1xf32>
    %cst_15 = arith.constant 0.000000e+00 : f32
    %28 = vector.broadcast %cst_15 : f32 to vector<8x1xf32>
    %29 = arith.maximumf %27, %28 : vector<8x1xf32>
    %30 = vector.broadcast %20 : vector<8x1xf32> to vector<8x128xf32>
    %31 = arith.subf %16, %30 : vector<8x128xf32>
    %cst_16 = arith.constant 9.99999974E-6 : f32
    %32 = vector.broadcast %cst_16 : f32 to vector<8x1xf32>
    %33 = arith.addf %29, %32 : vector<8x1xf32>
    %34 = math.rsqrt %33 : vector<8x1xf32>
    %35 = vector.broadcast %34 : vector<8x1xf32> to vector<8x128xf32>
    %36 = arith.mulf %31, %35 : vector<8x128xf32>
    %c0_17 = arith.constant 0 : index
    %c0_18 = arith.constant 0 : index
    %37 = vector.load %arg6[%c0_17, %c0_18] : memref<1x128xf32, #tpu.memory_space<vmem>>, vector<1x128xf32>
    %38 = vector.broadcast %37 : vector<1x128xf32> to vector<8x128xf32>
    %39 = arith.mulf %36, %38 : vector<8x128xf32>
    %c0_19 = arith.constant 0 : index
    %c0_20 = arith.constant 0 : index
    %40 = vector.load %arg7[%c0_19, %c0_20] : memref<1x128xf32, #tpu.memory_space<vmem>>, vector<1x128xf32>
    %41 = vector.broadcast %40 : vector<1x128xf32> to vector<8x128xf32>
    %42 = arith.addf %39, %41 : vector<8x128xf32>
    %c0_21 = arith.constant 0 : index
    %c0_22 = arith.constant 0 : index
    %43 = vector.load %arg8[%c0_21, %c0_22] : memref<8x128xf32, #tpu.memory_space<vmem>>, vector<8x128xf32>
    tpu.vector_store %arg8[%c0_21, %c0_22], %42 {strides = array<i32>} : memref<8x128xf32, #tpu.memory_space<vmem>>, vector<8x128xf32>,
    return
  }
  func.func @transform_0(%arg0: i32) -> (i32, i32) {
    %c0_i32 = arith.constant 0 : i32
    %c0_i32_0 = arith.constant 0 : i32
    return %arg0, %c0_i32 : i32, i32
  }
  func.func @transform_1(%arg0: i32) -> (i32, i32) {
    %c0_i32 = arith.constant 0 : i32
    %c0_i32_0 = arith.constant 0 : i32
    %c0_i32_1 = arith.constant 0 : i32
    return %c0_i32, %c0_i32_0 : i32, i32
  }
  func.func @transform_2(%arg0: i32) -> (i32, i32) {
    %c0_i32 = arith.constant 0 : i32
    %c0_i32_0 = arith.constant 0 : i32
    %c0_i32_1 = arith.constant 0 : i32
    return %c0_i32, %c0_i32_0 : i32, i32
  }
  func.func @transform_3(%arg0: i32) -> (i32, i32) {
    %c0_i32 = arith.constant 0 : i32
    %c0_i32_0 = arith.constant 0 : i32
    %c0_i32_1 = arith.constant 0 : i32
    return %c0_i32, %c0_i32_0 : i32, i32
  }
  func.func @transform_4(%arg0: i32) -> (i32, i32) {
    %c0_i32 = arith.constant 0 : i32
    %c0_i32_0 = arith.constant 0 : i32
    %c0_i32_1 = arith.constant 0 : i32
    return %c0_i32, %c0_i32_0 : i32, i32
  }
  func.func @transform_5(%arg0: i32) -> (i32, i32) {
    %c0_i32 = arith.constant 0 : i32
    %c0_i32_0 = arith.constant 0 : i32
    %c0_i32_1 = arith.constant 0 : i32
    return %c0_i32, %c0_i32_0 : i32, i32
  }
  func.func @transform_6(%arg0: i32) -> (i32, i32) {
    %c0_i32 = arith.constant 0 : i32
    %c0_i32_0 = arith.constant 0 : i32
    %c0_i32_1 = arith.constant 0 : i32
    return %c0_i32, %c0_i32_0 : i32, i32
  }
  func.func @transform_7(%arg0: i32) -> (i32, i32) {
    %c0_i32 = arith.constant 0 : i32
    %c0_i32_0 = arith.constant 0 : i32
    return %arg0, %c0_i32 : i32, i32
  }
}

</mosaic_0001>

<llo_original>
// kernel: tpu_custom_call.1
$region0: #{tpu_custom_call.1}
  #allocation0 [shape = 'u32[]', space=smem, size = 0x4, offset = 0x4, fixed_abs, tag = 'smem constant byte address 0x4 - core index']
  #allocation1 [shape = 'u32[72,128]{1,0:T(1,128)}', space=vmem, size = 0x9000, scoped, tag = 'internal scratch']
  %s0 = inlined_call_operand.hbm [shape: bf16[8,128], index: 0, kind: input, shape index: {}]
  %s1 = inlined_call_operand.hbm [shape: bf16[128,256], index: 1, kind: input, shape index: {}]
  %s2 = inlined_call_operand.vmem [shape: f32[1,128], index: 2, kind: input, shape index: {}]
  %s3 = inlined_call_operand.hbm [shape: bf16[128,128], index: 3, kind: input, shape index: {}]
  %s4 = inlined_call_operand.vmem [shape: f32[1,128], index: 4, kind: input, shape index: {}]
  %s5 = inlined_call_operand.vmem [shape: f32[1,128], index: 5, kind: input, shape index: {}]
  %s6 = inlined_call_operand.vmem [shape: f32[1,128], index: 6, kind: input, shape index: {}]
  %s7 = inlined_call_operand.hbm [shape: f32[8,128], index: 7, kind: output, shape index: {}]
  %s8 = sld [smem:[#allocation0]]
  $region50: #{tpu_custom_call.1} parent=0
    _
  %s10 = ssub.s32 1, %s8
  %s11 = scalar_select 0, %s10, %s8
  $region1: #{tpu_custom_call.1} parent=0
    #allocation2 [shape = 'u8[2048]{0}', space=vmem, size = 0x800, scoped, tag = 'input window, operand 0, single buffered']
    #allocation3 [shape = 's32[1]{0}', space=sflag, size = 0x4, scoped, tag = 'scoped memory for tpu_custom_call.1']
    #allocation4 [shape = 's32[1]{0}', space=sflag, size = 0x4, scoped, tag = 'scoped memory for tpu_custom_call.1']
    #allocation5 [shape = 'u8[65536]{0}', space=vmem, size = 0x10000, scoped, tag = 'input window, operand 1, single buffered']
    #allocation6 [shape = 's32[1]{0}', space=sflag, size = 0x4, scoped, tag = 'scoped memory for tpu_custom_call.1']
    #allocation7 [shape = 'u8[32768]{0}', space=vmem, size = 0x8000, scoped, tag = 'input window, operand 3, single buffered']
    #allocation8 [shape = 'u8[4096]{0}', space=vmem, size = 0x1000, scoped, tag = 'output window, operand 0, single buffered']
    %12 = vsyncpa [#allocation3], 0
    %13 = vsyncpa [#allocation6], 0
    %14 = vsyncpa [#allocation4], 0
    // Predicated region
    $region2: #{tpu_custom_call.1} parent=1 // pred_check
      _
    $region3: #{tpu_custom_call.1} parent=1 // pred_check_branch
      %16 = sbr.rel (0) target = $region5
    $region4: #{tpu_custom_call.1} parent=1 // pred_region
      %18 = vsyncadd [#allocation3], 0
      %s20 = sshll.u32 %s0, 4
      %s21 = int_to_ptr.hbm [resolvable:$true] %s20
      %s22 = sshll.u32 [#allocation2], 4
      %s23 = int_to_ptr.vmem [resolvable:$true] %s22
      %25 = dma.hbm_to_vmem [thread:$0]  %s21, 64, %s23, [#allocation3]
    $region5: #{tpu_custom_call.1} parent=1 // pred_fallthru
      _
    // Predicated region
    $region6: #{tpu_custom_call.1} parent=1 // pred_check
      _
    $region7: #{tpu_custom_call.1} parent=1 // pred_check_branch
      %27 = sbr.rel (0) target = $region9
    $region8: #{tpu_custom_call.1} parent=1 // pred_region
      %29 = vsyncadd [#allocation6], 0
      %s30 = sshll.u32 %s1, 4
      %s31 = int_to_ptr.hbm [resolvable:$true] %s30
      %s32 = sshll.u32 [#allocation5], 4
      %s33 = int_to_ptr.vmem [resolvable:$true] %s32
      %38 = dma.hbm_to_vmem [thread:$0]  %s31, 2048, %s33, [#allocation6], 128, 128, 8
    $region9: #{tpu_custom_call.1} parent=1 // pred_fallthru
      _
    // Predicated region
    $region10: #{tpu_custom_call.1} parent=1 // pred_check
      _
    $region11: #{tpu_custom_call.1} parent=1 // pred_check_branch
      %40 = sbr.rel (0) target = $region13
    $region12: #{tpu_custom_call.1} parent=1 // pred_region
      _
    $region13: #{tpu_custom_call.1} parent=1 // pred_fallthru
      _
    // Predicated region
    $region14: #{tpu_custom_call.1} parent=1 // pred_check
      _
    $region15: #{tpu_custom_call.1} parent=1 // pred_check_branch
      %42 = sbr.rel (0) target = $region17
    $region16: #{tpu_custom_call.1} parent=1 // pred_region
      %44 = vsyncadd [#allocation6], 0
      %s45 = sshll.u32 %s3, 4
      %s46 = int_to_ptr.hbm [resolvable:$true] %s45
      %s47 = sshll.u32 [#allocation7], 4
      %s48 = int_to_ptr.vmem [resolvable:$true] %s47
      %53 = dma.hbm_to_vmem [thread:$0]  %s46, 1024, %s48, [#allocation6], 64, 64, 4
    $region17: #{tpu_custom_call.1} parent=1 // pred_fallthru
      _
    // Predicated region
    $region18: #{tpu_custom_call.1} parent=1 // pred_check
      _
    $region19: #{tpu_custom_call.1} parent=1 // pred_check_branch
      %55 = sbr.rel (0) target = $region21
    $region20: #{tpu_custom_call.1} parent=1 // pred_region
      _
    $region21: #{tpu_custom_call.1} parent=1 // pred_fallthru
      _
    // Predicated region
    $region22: #{tpu_custom_call.1} parent=1 // pred_check
      _
    $region23: #{tpu_custom_call.1} parent=1 // pred_check_branch
      %57 = sbr.rel (0) target = $region25
    $region24: #{tpu_custom_call.1} parent=1 // pred_region
      _
    $region25: #{tpu_custom_call.1} parent=1 // pred_fallthru
      _
    // Predicated region
    $region26: #{tpu_custom_call.1} parent=1 // pred_check
      _
    $region27: #{tpu_custom_call.1} parent=1 // pred_check_branch
      %59 = sbr.rel (0) target = $region29
    $region28: #{tpu_custom_call.1} parent=1 // pred_region
      _
    $region29: #{tpu_custom_call.1} parent=1 // pred_fallthru
      _
    // Predicated region
    $region30: #{tpu_custom_call.1} parent=1 // pred_check
      _
    $region31: #{tpu_custom_call.1} parent=1 // pred_check_branch
      %61 = sbr.rel (0) target = $region33
    $region32: #{tpu_custom_call.1} parent=1 // pred_region
      %63 = dma.done [#allocation3], 64
    $region33: #{tpu_custom_call.1} parent=1 // pred_fallthru
      _
    // Predicated region
    $region34: #{tpu_custom_call.1} parent=1 // pred_check
      _
    $region35: #{tpu_custom_call.1} parent=1 // pred_check_branch
      %65 = sbr.rel (0) target = $region37
    $region36: #{tpu_custom_call.1} parent=1 // pred_region
      %67 = dma.done [#allocation6], 2048
    $region37: #{tpu_custom_call.1} parent=1 // pred_fallthru
      _
    // Predicated region
    $region38: #{tpu_custom_call.1} parent=1 // pred_check
      _
    $region39: #{tpu_custom_call.1} parent=1 // pred_check_branch
      %69 = sbr.rel (0) target = $region41
    $region40: #{tpu_custom_call.1} parent=1 // pred_region
      %71 = dma.done [#allocation6], 1024
    $region41: #{tpu_custom_call.1} parent=1 // pred_fallthru
      _
    %v72 = vld [vmem:[#allocation2] sm:$0xf]
    %v73 = vld [vmem:[#allocation5] sm:$0xff]
    %v74 = vld [vmem:[#allocation5 + $0x8] sm:$0xff]
    %v75 = vld [vmem:[#allocation5 + $0x10] sm:$0xff]
    %v76 = vld [vmem:[#allocation5 + $0x18] sm:$0xff]
    %v77 = vld [vmem:[#allocation5 + $0x20] sm:$0xff]
    %v78 = vld [vmem:[#allocation5 + $0x28] sm:$0xff]
    %v79 = vld [vmem:[#allocation5 + $0x30] sm:$0xff]
    %v80 = vld [vmem:[#allocation5 + $0x38] sm:$0xff]
    %v81 = vld [vmem:[#allocation5 + $0x40] sm:$0xff]
    %v82 = vld [vmem:[#allocation5 + $0x48] sm:$0xff]
    %v83 = vld [vmem:[#allocation5 + $0x50] sm:$0xff]
    %v84 = vld [vmem:[#allocation5 + $0x58] sm:$0xff]
    %v85 = vld [vmem:[#allocation5 + $0x60] sm:$0xff]
    %v86 = vld [vmem:[#allocation5 + $0x68] sm:$0xff]
    %v87 = vld [vmem:[#allocation5 + $0x70] sm:$0xff]
    %v88 = vld [vmem:[#allocation5 + $0x78] sm:$0xff]
    %v105 = vunpack.c.l.b16 %v73
    %v106 = vunpack.c.h.b16 %v73
    %v107 = vunpack.c.l.b16 %v74
    %v108 = vunpack.c.h.b16 %v74
    %v109 = vunpack.c.l.b16 %v75
    %v110 = vunpack.c.h.b16 %v75
    %v111 = vunpack.c.l.b16 %v76
    %v112 = vunpack.c.h.b16 %v76
    %v113 = vunpack.c.l.b16 %v77
    %v114 = vunpack.c.h.b16 %v77
    %v115 = vunpack.c.l.b16 %v78
    %v116 = vunpack.c.h.b16 %v78
    %v117 = vunpack.c.l.b16 %v79
    %v118 = vunpack.c.h.b16 %v79
    %v119 = vunpack.c.l.b16 %v80
    %v120 = vunpack.c.h.b16 %v80
    %v121 = vunpack.c.l.b16 %v81
    %v122 = vunpack.c.h.b16 %v81
    %v123 = vunpack.c.l.b16 %v82
    %v124 = vunpack.c.h.b16 %v82
    %v125 = vunpack.c.l.b16 %v83
    %v126 = vunpack.c.h.b16 %v83
    %v127 = vunpack.c.l.b16 %v84
    %v128 = vunpack.c.h.b16 %v84
    %v129 = vunpack.c.l.b16 %v85
    %v130 = vunpack.c.h.b16 %v85
    %v131 = vunpack.c.l.b16 %v86
    %v132 = vunpack.c.h.b16 %v86
    %v133 = vunpack.c.l.b16 %v87
    %v134 = vunpack.c.h.b16 %v87
    %v135 = vunpack.c.l.b16 %v88
    %v136 = vunpack.c.h.b16 %v88
    %v137 = vpack.c.b16 %v107, %v105
    %v138 = vpack.c.b16 %v108, %v106
    %v139 = vpack.c.b16 %v111, %v109
    %v140 = vpack.c.b16 %v112, %v110
    %v141 = vpack.c.b16 %v115, %v113
    %v142 = vpack.c.b16 %v116, %v114
    %v143 = vpack.c.b16 %v119, %v117
    %v144 = vpack.c.b16 %v120, %v118
    %v145 = vpack.c.b16 %v123, %v121
    %v146 = vpack.c.b16 %v124, %v122
    %v147 = vpack.c.b16 %v127, %v125
    %v148 = vpack.c.b16 %v128, %v126
    %v149 = vpack.c.b16 %v131, %v129
    %v150 = vpack.c.b16 %v132, %v130
    %v151 = vpack.c.b16 %v135, %v133
    %v152 = vpack.c.b16 %v136, %v134
    %169 = vmatpush.bf16.msra.mxu0 %v151
    %170 = vmatpush.bf16.msra.mxu0 %v149
    %171 = vmatpush.bf16.msra.mxu0 %v147
    %172 = vmatpush.bf16.msra.mxu0 %v145
    %173 = vmatpush.bf16.msra.mxu0 %v143
    %174 = vmatpush.bf16.msra.mxu0 %v141
    %175 = vmatpush.bf16.msra.mxu0 %v139
    %176 = vmatpush.bf16.msra.mxu0 %v137
    %177 = vmatmul.bf16.gmra.mxu0 %v72
    %v178 = vpop.f32.mrf.mxu0
    %v179 = vadd.f32 0.0, %v178
    %v180 = vpop.f32.mrf.mxu0
    %181 = vdwg.mxu0
    %182 = vmatpush.bf16.msra.mxu0 %v152
    %183 = vmatpush.bf16.msra.mxu0 %v150
    %184 = vmatpush.bf16.msra.mxu0 %v148
    %185 = vmatpush.bf16.msra.mxu0 %v146
    %186 = vmatpush.bf16.msra.mxu0 %v144
    %187 = vmatpush.bf16.msra.mxu0 %v142
    %188 = vmatpush.bf16.msra.mxu0 %v140
    %189 = vmatpush.bf16.msra.mxu0 %v138
    %190 = vmatmul.bf16.gmra.mxu0 %v72
    %v191 = vpop.f32.mrf.mxu0
    %v192 = vadd.f32 0.0, %v191
    %v193 = vpop.f32.mrf.mxu0
    %194 = vdwg.mxu0
    %v195 = vld [vmem:[%s2] sm:$0x1]
    %v197 = vperm.slane %v195, 0
    %v199 = vadd.f32 %v179, %v197
    %v200 = vmax.f32 %v199, 0.0
    %v201 = vpack.c.bf16 %v200, %v200
    %v202 = vld [vmem:[#allocation7] sm:$0xf]
    %v203 = vld [vmem:[#allocation7 + $0x4] sm:$0xf]
    %v204 = vld [vmem:[#allocation7 + $0x8] sm:$0xf]
    %v205 = vld [vmem:[#allocation7 + $0xc] sm:$0xf]
    %v206 = vld [vmem:[#allocation7 + $0x10] sm:$0xf]
    %v207 = vld [vmem:[#allocation7 + $0x14] sm:$0xf]
    %v208 = vld [vmem:[#allocation7 + $0x18] sm:$0xf]
    %v209 = vld [vmem:[#allocation7 + $0x1c] sm:$0xf]
    %v210 = vld [vmem:[#allocation7 + $0x20] sm:$0xf]
    %v211 = vld [vmem:[#allocation7 + $0x24] sm:$0xf]
    %v212 = vld [vmem:[#allocation7 + $0x28] sm:$0xf]
    %v213 = vld [vmem:[#allocation7 + $0x2c] sm:$0xf]
    %v214 = vld [vmem:[#allocation7 + $0x30] sm:$0xf]
    %v215 = vld [vmem:[#allocation7 + $0x34] sm:$0xf]
    %v216 = vld [vmem:[#allocation7 + $0x38] sm:$0xf]
    %v217 = vld [vmem:[#allocation7 + $0x3c] sm:$0xf]
    %v234 = vunpack.c.l.b16 %v202
    %v235 = vunpack.c.l.b16 %v203
    %v236 = vunpack.c.l.b16 %v204
    %v237 = vunpack.c.l.b16 %v205
    %v238 = vunpack.c.l.b16 %v206
    %v239 = vunpack.c.l.b16 %v207
    %v240 = vunpack.c.l.b16 %v208
    %v241 = vunpack.c.l.b16 %v209
    %v242 = vunpack.c.l.b16 %v210
    %v243 = vunpack.c.l.b16 %v211
    %v244 = vunpack.c.l.b16 %v212
    %v245 = vunpack.c.l.b16 %v213
    %v246 = vunpack.c.l.b16 %v214
    %v247 = vunpack.c.l.b16 %v215
    %v248 = vunpack.c.l.b16 %v216
    %v249 = vunpack.c.l.b16 %v217
    %v250 = vpack.c.b16 %v235, %v234
    %v251 = vpack.c.b16 %v237, %v236
    %v252 = vpack.c.b16 %v239, %v238
    %v253 = vpack.c.b16 %v241, %v240
    %v254 = vpack.c.b16 %v243, %v242
    %v255 = vpack.c.b16 %v245, %v244
    %v256 = vpack.c.b16 %v247, %v246
    %v257 = vpack.c.b16 %v249, %v248
    %266 = vmatpush.bf16.msra.mxu0 %v257
    %267 = vmatpush.bf16.msra.mxu0 %v256
    %268 = vmatpush.bf16.msra.mxu0 %v255
    %269 = vmatpush.bf16.msra.mxu0 %v254
    %270 = vmatpush.bf16.msra.mxu0 %v253
    %271 = vmatpush.bf16.msra.mxu0 %v252
    %272 = vmatpush.bf16.msra.mxu0 %v251
    %273 = vmatpush.bf16.msra.mxu0 %v250
    %274 = vmatmul.bf16.gmra.mxu0 %v201
    %v275 = vpop.f32.mrf.mxu0
    %v276 = vadd.f32 %v192, %v275
    %v277 = vpop.f32.mrf.mxu0
    %278 = vdwg.mxu0
    %v279 = vld [vmem:[%s4] sm:$0x1]
    %v281 = vperm.slane %v279, 0
    %v283 = vadd.f32 %v276, %v281
    %284 = vadd.xlane.f32.xlu0 %v283
    %v285 = vpop.xlane.xlu0 %284
    %v286 = vmul.f32 %v285, 0.0625
    %v287 = vmul.f32 %v283, %v283
    %288 = vadd.xlane.f32.xlu0 %v287
    %v289 = vpop.xlane.xlu0 %288
    %v290 = vmul.f32 %v289, 0.0625
    %v291 = vmul.f32 %v286, %v286
    %v292 = vsub.f32 %v290, %v291
    %v293 = vmax.f32 %v292, 0.0
    %v294 = vsub.f32 %v283, %v286
    %v295 = vadd.f32 %v293, 1e-05
    %v296 = vrsqrt.pop %v295
    %v297 = vmul.f32 %v296, %v295
    %v298 = vmul.f32 %v297, %v296
    %v299 = vmul.f32 0.5, %v298
    %v300 = vsub.f32 1.5, %v299
    %v301 = vmul.f32 %v296, %v300
    %vm302 = vweird.f32 %v295
    %vm303 = vweird.f32 %v296
    %vm304 = vmor %vm302, %vm303
    %v305 = vsel %vm304, %v296, %v301
    %v306 = vmul.f32 %v294, %v305
    %v307 = vld [vmem:[%s5] sm:$0x1]
    %v309 = vperm.slane %v307, 0
    %v311 = vmul.f32 %v306, %v309
    %v312 = vld [vmem:[%s6] sm:$0x1]
    %v314 = vperm.slane %v312, 0
    %v316 = vadd.f32 %v311, %v314
    %317 = vst [vmem:[#allocation8] sm:$0xff] %v316
    // Predicated region
    $region42: #{tpu_custom_call.1} parent=1 // pred_check
      _
    $region43: #{tpu_custom_call.1} parent=1 // pred_check_branch
      %319 = sbr.rel (0) target = $region45
    $region44: #{tpu_custom_call.1} parent=1 // pred_region
      %321 = vsyncadd [#allocation4], 0
      %s323 = sshll.u32 [#allocation8], 4
      %s324 = int_to_ptr.vmem [resolvable:$true] %s323
      %s325 = sshll.u32 %s7, 4
      %s326 = int_to_ptr.hbm [resolvable:$true] %s325
      %328 = dma.vmem_to_hbm [thread:$0]  %s324, 128, %s326, [#allocation4]
    $region45: #{tpu_custom_call.1} parent=1 // pred_fallthru
      _
    // Predicated region
    $region46: #{tpu_custom_call.1} parent=1 // pred_check
      _
    $region47: #{tpu_custom_call.1} parent=1 // pred_check_branch
      %330 = sbr.rel (0) target = $region49
    $region48: #{tpu_custom_call.1} parent=1 // pred_region
      %332 = dma.done [#allocation4], 128
    $region49: #{tpu_custom_call.1} parent=1 // pred_fallthru
      _
    %333 = vsyncpa [#allocation3], 1
    %334 = vsyncpa [#allocation6], 1
    %335 = vsyncpa [#allocation4], 1

</llo_original>
